<compile_context>
chip_gen: v5e
topology: v5e:2x2
jax: 0.10.0
libtpu: 0.0.40
codegen_flags: <defaults>
</compile_context>

<pallas_src>
import functools

import jax
import jax.numpy as jnp
from jax.experimental import pallas as pl
from jax.experimental.pallas import tpu as pltpu

# Explicit scoped-VMEM budget: above the ~15 MB worst-case per-step working
# set at tm=1024, below v7x's 64 MiB physical per-TC VMEM.
_VMEM_LIMIT_BYTES = 48 * 1024 * 1024


def _round_up(x, m):
    return (x + m - 1) // m * m


def _pick_rows_tile(m, cap, align=16, min_tiles=2):
    """Pick (row_tile, padded_rows).

    Large tiles amortize the ~0.35 us/step pipeline overhead, but the grid is
    never collapsed to a single block when it can be split, so the "parallel"
    M axis always gives v7x's second TensorCore work.  Tiles are multiples of
    16 (bf16 sublane packing) unless the whole extent is used unsplit.
    """
    if m <= cap:
        if m >= min_tiles * align:
            tm = _round_up(-(-m // min_tiles), align)   # ceil(m/2), 16-aligned
        else:
            tm = m            # too small to split; block == full extent
    else:
        tm = cap
    return tm, _round_up(m, tm)


# ---------------------------------------------------------------------------
# Pallas kernels
# ---------------------------------------------------------------------------
def _mm_bias_kernel(a_ref, b_ref, bias_ref, o_ref, *, relu):
    """o = relu?(a @ b + bias). a/b bf16; accumulate + epilogue in f32; o bf16."""
    y = jnp.dot(a_ref[...], b_ref[...], preferred_element_type=jnp.float32)
    y = y + bias_ref[...]
    if relu:
        y = jnp.maximum(y, 0.0)
    o_ref[...] = y.astype(o_ref.dtype)


def _mm_bias_res_kernel(a_ref, b_ref, bias_ref, res_ref, o_ref, *, relu):
    """o = relu?(a @ b + bias + residual). Residual streamed in bf16."""
    y = jnp.dot(a_ref[...], b_ref[...], preferred_element_type=jnp.float32)
    y = y + bias_ref[...] + res_ref[...].astype(jnp.float32)
    if relu:
        y = jnp.maximum(y, 0.0)
    o_ref[...] = y.astype(o_ref.dtype)


def matmul_bias_act(a, b, bias, residual, relu, row_cap=1024):
    """out = relu?((a @ b) + bias [+ residual]), bf16 output.

    a: [M, K] bf16 im2col slab, b: [K, Cout] bf16 (BN scale folded in),
    bias: f32 [Cout], residual: bf16 [M, Cout] or None.  Full-K / full-N
    blocks (no K loop, no accumulator scratch); only M is tiled ("parallel").
    """
    M, K = a.shape
    _, N = b.shape
    tm, Mp = _pick_rows_tile(M, row_cap)
    if Mp != M:
        a = jnp.pad(a, ((0, Mp - M), (0, 0)))
        if residual is not None:
            residual = jnp.pad(residual, ((0, Mp - M), (0, 0)))
    bias2 = bias.reshape(1, N).astype(jnp.float32)
    grid = (Mp // tm,)

    if residual is None:
        kernel = functools.partial(_mm_bias_kernel, relu=relu)
        in_specs = [
            pl.BlockSpec((tm, K), lambda i: (i, 0)),
            pl.BlockSpec((K, N), lambda i: (0, 0)),
            pl.BlockSpec((1, N), lambda i: (0, 0)),
        ]
        args = (a, b, bias2)
    else:
        kernel = functools.partial(_mm_bias_res_kernel, relu=relu)
        in_specs = [
            pl.BlockSpec((tm, K), lambda i: (i, 0)),
            pl.BlockSpec((K, N), lambda i: (0, 0)),
            pl.BlockSpec((1, N), lambda i: (0, 0)),
            pl.BlockSpec((tm, N), lambda i: (i, 0)),
        ]
        args = (a, b, bias2, residual.astype(jnp.bfloat16))

    out = pl.pallas_call(
        kernel,
        out_shape=jax.ShapeDtypeStruct((Mp, N), jnp.bfloat16),
        grid_spec=pltpu.PrefetchScalarGridSpec(
            num_scalar_prefetch=0,
            grid=grid,
            in_specs=in_specs,
            out_specs=pl.BlockSpec((tm, N), lambda i: (i, 0)),
        ),
        compiler_params=pltpu.CompilerParams(
            dimension_semantics=("parallel",),
            vmem_limit_bytes=_VMEM_LIMIT_BYTES),
    )(*args)
    return out[:M] if Mp != M else out


def _maxpool_kernel(p_ref, o_ref):
    """Max over the leading (window-tap) axis: [P, tm, C] -> [tm, C]."""
    m = p_ref[0]
    for i in range(1, p_ref.shape[0]):
        m = jnp.maximum(m, p_ref[i])
    o_ref[...] = m


def _maxpool_rows(patches, row_cap):
    P, M, C = patches.shape
    tm, Mp = _pick_rows_tile(M, row_cap)
    if Mp != M:
        patches = jnp.pad(patches, ((0, 0), (0, Mp - M), (0, 0)))
    out = pl.pallas_call(
        _maxpool_kernel,
        out_shape=jax.ShapeDtypeStruct((Mp, C), patches.dtype),
        grid_spec=pltpu.PrefetchScalarGridSpec(
            num_scalar_prefetch=0,
            grid=(Mp // tm,),
            in_specs=[pl.BlockSpec((P, tm, C), lambda i: (0, i, 0))],
            out_specs=pl.BlockSpec((tm, C), lambda i: (i, 0)),
        ),
        compiler_params=pltpu.CompilerParams(
            dimension_semantics=("parallel",),
            vmem_limit_bytes=_VMEM_LIMIT_BYTES),
    )(patches)
    return out[:M] if Mp != M else out


def maxpool_reduce(patches, row_cap=1024):
    """patches: [P, M, C] -> [M, C], tiled over rows.

    Elementwise max is layout-agnostic, so when M*C is a lane multiple the
    slab is viewed as [P, M*C/128, 128]: full-lane (unmasked) stores instead
    of C=64 masked partial stores.
    """
    P, M, C = patches.shape
    if (M * C) % 128 == 0 and C != 128:
        flat = patches.reshape(P, (M * C) // 128, 128)
        return _maxpool_rows(flat, row_cap).reshape(M, C)
    return _maxpool_rows(patches, row_cap)


# ---------------------------------------------------------------------------
# JAX glue: im2col patch extraction, layer composition, parameter init
# ---------------------------------------------------------------------------
def _im2col(x, kh, kw, stride, padding, pad_value=0.0):
    """x: [N, H, W, C] -> ([N*Ho*Wo, kh*kw*C], Ho, Wo)."""
    N, H, W, C = x.shape
    xp = jnp.pad(x, ((0, 0), (padding, padding), (padding, padding), (0, 0)),
                 constant_values=pad_value)
    Ho = (H + 2 * padding - kh) // stride + 1
    Wo = (W + 2 * padding - kw) // stride + 1
    cols = []
    for i in range(kh):
        for j in range(kw):
            cols.append(xp[:, i:i + stride * Ho:stride,
                           j:j + stride * Wo:stride, :])
    patches = jnp.stack(cols, axis=3)  # [N, Ho, Wo, kh*kw, C]
    return patches.reshape(N * Ho * Wo, kh * kw * C), Ho, Wo


def conv_bn(x, w_oihw, bn_scale, bn_bias, stride, padding, relu, residual=None):
    """Conv2d (no bias, PyTorch OIHW weight) + folded BN + optional residual/ReLU.

    Activations/weights/residual run through the kernel in bf16; accumulation
    and the BN-bias epilogue stay in f32 inside the kernel; output is bf16.
    """
    Nb = x.shape[0]
    Cout, Cin, KH, KW = w_oihw.shape
    a, Ho, Wo = _im2col(x.astype(jnp.bfloat16), KH, KW, stride, padding)
    # Fold the BN scale into the weight columns host-side; only the bias is
    # left in the kernel epilogue.
    w = jnp.transpose(w_oihw, (2, 3, 1, 0)).reshape(KH * KW * Cin, Cout)
    b = (w * bn_scale[None, :]).astype(jnp.bfloat16)
    res = None
    if residual is not None:
        res = residual.reshape(Nb * Ho * Wo, Cout).astype(jnp.bfloat16)
    y = matmul_bias_act(a, b, bn_bias, res, relu)
    return y.reshape(Nb, Ho, Wo, Cout)


def maxpool_3x3_s2_p1(x):
    N, H, W, C = x.shape
    xp = jnp.pad(x.astype(jnp.bfloat16),
                 ((0, 0), (1, 1), (1, 1), (0, 0)),
                 constant_values=-jnp.inf)
    Ho = (H + 2 - 3) // 2 + 1
    Wo = (W + 2 - 3) // 2 + 1
    cols = []
    for i in range(3):
        for j in range(3):
            cols.append(xp[:, i:i + 2 * Ho:2, j:j + 2 * Wo:2, :])
    patches = jnp.stack(cols, axis=0).reshape(9, N * Ho * Wo, C)
    y = maxpool_reduce(patches)
    return y.reshape(N, Ho, Wo, C)


def _conv_w(key, cout, cin, k):
    fan_in = cin * k * k
    std = (2.0 / fan_in) ** 0.5
    return jax.random.normal(key, (cout, cin, k, k), jnp.float32) * std


def _bn_params(key, c, eps=1e-5):
    k1, k2, k3, k4 = jax.random.split(key, 4)
    gamma = 1.0 + 0.1 * jax.random.normal(k1, (c,), jnp.float32)
    beta = 0.1 * jax.random.normal(k2, (c,), jnp.float32)
    mean = 0.1 * jax.random.normal(k3, (c,), jnp.float32)
    var = jax.random.uniform(k4, (c,), jnp.float32, minval=0.5, maxval=1.5)
    scale = gamma * jax.lax.rsqrt(var + eps)
    bias = beta - mean * scale
    return scale, bias


def init_basic_block(key, cin, cout, stride):
    keys = jax.random.split(key, 6)
    p = {
        "w1": _conv_w(keys[0], cout, cin, 3),
        "bn1": _bn_params(keys[1], cout),
        "w2": _conv_w(keys[2], cout, cout, 3),
        "bn2": _bn_params(keys[3], cout),
        "stride": stride,
    }
    if stride != 1 or cin != cout:
        p["wd"] = _conv_w(keys[4], cout, cin, 1)
        p["bnd"] = _bn_params(keys[5], cout)
    return p


def basic_block(x, p):
    s = p["stride"]
    t = conv_bn(x, p["w1"], *p["bn1"], stride=s, padding=1, relu=True)
    if "wd" in p:
        identity = conv_bn(x, p["wd"], *p["bnd"], stride=s, padding=0,
                           relu=False)
    else:
        identity = x
    return conv_bn(t, p["w2"], *p["bn2"], stride=1, padding=1, relu=True,
                   residual=identity)


def init_resnet(key):
    keys = jax.random.split(key, 8)
    return {
        "conv0_w": _conv_w(keys[0], 64, 3, 7),
        "bn0": _bn_params(keys[1], 64),
        "stage1": [init_basic_block(keys[2], 64, 64, 1),
                   init_basic_block(keys[3], 64, 64, 1)],
        "stage2": [init_basic_block(keys[4], 64, 128, 2),
                   init_basic_block(keys[5], 128, 128, 1)],
        "stage3": [init_basic_block(keys[6], 128, 256, 2),
                   init_basic_block(keys[7], 256, 256, 1)],
    }


def resnet_forward(x_nchw, params):
    """Matches Resnet.forward: returns (y1, y2, y3, out) in NCHW, f32."""
    x = jnp.transpose(x_nchw, (0, 2, 3, 1)).astype(jnp.float32)  # -> NHWC

    # layer0 (conv 7x7 s2) + layer1 (bn, relu), fused in one Pallas kernel.
    # Pad Cin 3 -> 4 (zeros in slab + weight) for a less ragged K on the MXU.
    x4 = jnp.pad(x, ((0, 0), (0, 0), (0, 0), (0, 1)))
    w0 = jnp.pad(params["conv0_w"], ((0, 0), (0, 1), (0, 0), (0, 0)))
    y1 = conv_bn(x4, w0, *params["bn0"], stride=2, padding=3, relu=True)

    # layer2: maxpool 3x3 s2 p1 + ResNet stage1
    y2 = maxpool_3x3_s2_p1(y1)
    for p in params["stage1"]:
        y2 = basic_block(y2, p)

    # layer3: ResNet stage2
    y3 = y2
    for p in params["stage2"]:
        y3 = basic_block(y3, p)

    # layer4: ResNet stage3
    out = y3
    for p in params["stage3"]:
        out = basic_block(out, p)

    to_nchw = lambda t: jnp.transpose(t, (0, 3, 1, 2)).astype(jnp.float32)
    return to_nchw(y1), to_nchw(y2), to_nchw(y3), to_nchw(out)


if __name__ == "__main__":
    key = jax.random.PRNGKey(0)
    kx, kp = jax.random.split(key)
    # PyTorch-style NCHW input; layer0 fixes Cin=3.
    x = jax.random.normal(kx, (2, 3, 32, 32), jnp.float32)
    params = init_resnet(kp)

    y1, y2, y3, out = resnet_forward(x, params)
    jax.block_until_ready((y1, y2, y3, out))

    assert y1.shape == (2, 64, 16, 16), y1.shape
    assert y2.shape == (2, 64, 8, 8), y2.shape
    assert y3.shape == (2, 128, 4, 4), y3.shape
    assert out.shape == (2, 256, 2, 2), out.shape
    assert all(jnp.isfinite(t).all() for t in (y1, y2, y3, out))
    print("KERNEL_OK")
</pallas_src>

<mosaic_0001>
module attributes {stable_mosaic.version = 11 : i64} {
  func.func @_mm_bias_kernel(%arg0: i32, %arg1: memref<256x196xbf16, #tpu.memory_space<vmem>>, %arg2: memref<196x64xbf16, #tpu.memory_space<vmem>>, %arg3: memref<1x64xf32, #tpu.memory_space<vmem>>, %arg4: memref<256x64xbf16, #tpu.memory_space<vmem>>) attributes {dimension_semantics = [#tpu.dimension_semantics<parallel>], iteration_bounds = array<i64: 2>, scalar_prefetch = 0 : i64, scratch_operands = 0 : i64, tpu.core_type = #tpu.core_type<tc>, window_params = [{transform_indices = @transform_0, window_bounds = array<i64: 256, 196>}, {pipeline_mode = #tpu.pipeline_mode<synchronous>, transform_indices = @transform_1, window_bounds = array<i64: 196, 64>}, {pipeline_mode = #tpu.pipeline_mode<synchronous>, transform_indices = @transform_2, window_bounds = array<i64: 1, 64>}, {transform_indices = @transform_3, window_bounds = array<i64: 256, 64>}]} {
    %c0 = arith.constant 0 : index
    %c0_0 = arith.constant 0 : index
    %0 = vector.load %arg1[%c0, %c0_0] : memref<256x196xbf16, #tpu.memory_space<vmem>>, vector<256x196xbf16>
    %c0_1 = arith.constant 0 : index
    %c0_2 = arith.constant 0 : index
    %1 = vector.load %arg2[%c0_1, %c0_2] : memref<196x64xbf16, #tpu.memory_space<vmem>>, vector<196x64xbf16>
    %cst = arith.constant dense<0.000000e+00> : vector<256x64xf32>
    %2 = tpu.matmul %0, %1, %cst {dimension_numbers = #tpu.dot_dimension_numbers<[1], [0], [0], [1], [0, 0, 1, 1], [], []>} : vector<256x196xbf16>, vector<196x64xbf16>, vector<256x64xf32> -> vector<256x64xf32>
    %c0_3 = arith.constant 0 : index
    %c0_4 = arith.constant 0 : index
    %3 = vector.load %arg3[%c0_3, %c0_4] : memref<1x64xf32, #tpu.memory_space<vmem>>, vector<1x64xf32>
    %4 = vector.broadcast %3 : vector<1x64xf32> to vector<256x64xf32>
    %5 = arith.addf %2, %4 : vector<256x64xf32>
    %cst_5 = arith.constant 0.000000e+00 : f32
    %6 = vector.broadcast %cst_5 : f32 to vector<256x64xf32>
    %7 = arith.maximumf %5, %6 : vector<256x64xf32>
    %8 = arith.truncf %7 : vector<256x64xf32> to vector<256x64xbf16>
    %c0_6 = arith.constant 0 : index
    %c0_7 = arith.constant 0 : index
    %9 = vector.load %arg4[%c0_6, %c0_7] : memref<256x64xbf16, #tpu.memory_space<vmem>>, vector<256x64xbf16>
    tpu.vector_store %arg4[%c0_6, %c0_7], %8 {strides = array<i32>} : memref<256x64xbf16, #tpu.memory_space<vmem>>, vector<256x64xbf16>,
    return
  }
  func.func @transform_0(%arg0: i32) -> (i32, i32) {
    %c0_i32 = arith.constant 0 : i32
    %c0_i32_0 = arith.constant 0 : i32
    return %arg0, %c0_i32 : i32, i32
  }
  func.func @transform_1(%arg0: i32) -> (i32, i32) {
    %c0_i32 = arith.constant 0 : i32
    %c0_i32_0 = arith.constant 0 : i32
    %c0_i32_1 = arith.constant 0 : i32
    return %c0_i32, %c0_i32_0 : i32, i32
  }
  func.func @transform_2(%arg0: i32) -> (i32, i32) {
    %c0_i32 = arith.constant 0 : i32
    %c0_i32_0 = arith.constant 0 : i32
    %c0_i32_1 = arith.constant 0 : i32
    return %c0_i32, %c0_i32_0 : i32, i32
  }
  func.func @transform_3(%arg0: i32) -> (i32, i32) {
    %c0_i32 = arith.constant 0 : i32
    %c0_i32_0 = arith.constant 0 : i32
    return %arg0, %c0_i32 : i32, i32
  }
}

</mosaic_0001>

<llo_original>
// kernel: tpu_custom_call.1
$region0: #{tpu_custom_call.1}
  #allocation0 [shape = 'u32[]', space=smem, size = 0x4, offset = 0x4, fixed_abs, tag = 'smem constant byte address 0x4 - core index']
  #allocation1 [shape = 'u32[72,128]{1,0:T(1,128)}', space=vmem, size = 0x9000, scoped, tag = 'internal scratch']
  %s0 = inlined_call_operand.vmem [shape: bf16[512,196], index: 0, kind: input, shape index: {}]
  %s1 = inlined_call_operand.vmem [shape: bf16[196,64], index: 1, kind: input, shape index: {}]
  %s2 = inlined_call_operand.vmem [shape: f32[1,64], index: 2, kind: input, shape index: {}]
  %s3 = inlined_call_operand.vmem [shape: bf16[512,64], index: 3, kind: output, shape index: {}]
  %s4 = sld [smem:[#allocation0]]
  $region45: #{tpu_custom_call.1} parent=0
    _
  %s6 = ssub.s32 1, %s4
  %s7 = scalar_select 0, %s6, %s4
  loop: start=0, step=1, limit=4
  $region2: #{tpu_custom_call.1} parent=0 // loop_pre_header
    _
  $region3: #{tpu_custom_call.1} parent=0 // loop_header
    %s9 = sphi 0, %s13
    %p10 = scmp.ge.s32.totalorder %s9, 4
    %s19 = sphi 0, %s21
    %s22 = sphi 0, %s19
    %s23 = sphi 0, %s22
    %s39 = sphi 0, %s23
    %s43 = sphi 0, %s43
    %s45 = sphi 0, %s43
    %s46 = sphi 0, %s45
    %s60 = sphi 0, %s46
    %s64 = sphi 0, %s64
    %s66 = sphi 0, %s64
    %s67 = sphi 0, %s66
    %s81 = sphi 0, %s67
    %s87 = sphi 0, %s89
    %s90 = sphi 0, %s87
    %s91 = sphi 0, %s90
    %s107 = sphi 0, %s91
  $region4: #{tpu_custom_call.1} parent=0 // loop_header_branch
    %12 = sbr.rel (%p10) target = $region8
  $region5: #{tpu_custom_call.1} parent=0 // loop_body
    %s14 = ssub.s32 %s9, 1
    %s15 = ssub.s32 %s9, 2
    %s16 = sadd.s32 %s9, 1
    %s17 = ssub.s32 %s9, %s16
    %p18 = scmp.eq.s32.totalorder %s17, 0
    %s20 = sadd.s32 %s19, 1
    %s21 = scalar_select %p18, %s19, %s20
    %p24 = pneg %p18
    %p25 = scmp.eq.s32.totalorder %s9, 1
    %p26 = por %p24, %p25
    %p27 = scmp.ne.s32.totalorder %s19, %s22
    %p28 = scmp.eq.s32.totalorder %s9, 0
    %p29 = por %p27, %p28
    %p30 = scmp.ne.s32.totalorder %s19, %s22
    %p31 = scmp.eq.s32.totalorder %s14, 1
    %p32 = por %p30, %p31
    %p33 = scmp.ne.s32.totalorder %s22, %s23
    %p34 = scmp.eq.s32.totalorder %s14, 0
    %p35 = por %p33, %p34
    %p36 = scmp.ne.s32.totalorder %s22, %s23
    %p37 = scmp.eq.s32.totalorder %s15, 1
    %p38 = por %p36, %p37
    %p40 = scmp.ne.s32.totalorder %s23, %s39
    %p41 = scmp.eq.s32.totalorder %s15, 0
    %p42 = por %p40, %p41
    %s44 = sadd.s32 %s43, 1
    %p47 = scmp.eq.s32.totalorder %s9, 1
    %p48 = scmp.ne.s32.totalorder %s43, %s45
    %p49 = scmp.eq.s32.totalorder %s9, 0
    %p50 = por %p48, %p49
    %p51 = scmp.ne.s32.totalorder %s43, %s45
    %p52 = scmp.eq.s32.totalorder %s14, 1
    %p53 = por %p51, %p52
    %p54 = scmp.ne.s32.totalorder %s45, %s46
    %p55 = scmp.eq.s32.totalorder %s14, 0
    %p56 = por %p54, %p55
    %p57 = scmp.ne.s32.totalorder %s45, %s46
    %p58 = scmp.eq.s32.totalorder %s15, 1
    %p59 = por %p57, %p58
    %p61 = scmp.ne.s32.totalorder %s46, %s60
    %p62 = scmp.eq.s32.totalorder %s15, 0
    %p63 = por %p61, %p62
    %s65 = sadd.s32 %s64, 1
    %p68 = scmp.eq.s32.totalorder %s9, 1
    %p69 = scmp.ne.s32.totalorder %s64, %s66
    %p70 = scmp.eq.s32.totalorder %s9, 0
    %p71 = por %p69, %p70
    %p72 = scmp.ne.s32.totalorder %s64, %s66
    %p73 = scmp.eq.s32.totalorder %s14, 1
    %p74 = por %p72, %p73
    %p75 = scmp.ne.s32.totalorder %s66, %s67
    %p76 = scmp.eq.s32.totalorder %s14, 0
    %p77 = por %p75, %p76
    %p78 = scmp.ne.s32.totalorder %s66, %s67
    %p79 = scmp.eq.s32.totalorder %s15, 1
    %p80 = por %p78, %p79
    %p82 = scmp.ne.s32.totalorder %s67, %s81
    %p83 = scmp.eq.s32.totalorder %s15, 0
    %p84 = por %p82, %p83
    %s85 = ssub.s32 %s9, %s16
    %p86 = scmp.eq.s32.totalorder %s85, 0
    %s88 = sadd.s32 %s87, 1
    %s89 = scalar_select %p86, %s87, %s88
    %p92 = pneg %p86
    %p93 = scmp.eq.s32.totalorder %s9, 1
    %p94 = por %p92, %p93
    %p95 = scmp.ne.s32.totalorder %s87, %s90
    %p96 = scmp.eq.s32.totalorder %s9, 0
    %p97 = por %p95, %p96
    %p98 = scmp.ne.s32.totalorder %s87, %s90
    %p99 = scmp.eq.s32.totalorder %s14, 1
    %p100 = por %p98, %p99
    %p101 = scmp.ne.s32.totalorder %s90, %s91
    %p102 = scmp.eq.s32.totalorder %s14, 0
    %p103 = por %p101, %p102
    %p104 = scmp.ne.s32.totalorder %s90, %s91
    %p105 = scmp.eq.s32.totalorder %s15, 1
    %p106 = por %p104, %p105
    %p108 = scmp.ne.s32.totalorder %s91, %s107
    %p109 = scmp.eq.s32.totalorder %s15, 0
    %p110 = por %p108, %p109
    %p111 = scmp.le.s32.totalorder 1, %s9
    %p112 = scmp.lt.s32.totalorder %s9, 3
    %p113 = pnand %p111, %p112
    %p114 = pneg %p113
    // Predicated region
    $region9: #{tpu_custom_call.1} parent=5 // pred_check
      _
    $region10: #{tpu_custom_call.1} parent=5 // pred_check_branch
      %116 = sbr.rel (%p113) target = $region12
    $region11: #{tpu_custom_call.1} parent=5 // pred_region
      %s117 = ssub.s32 %s9, 1
      // Predicated region
      $region13: #{tpu_custom_call.1} parent=11 // pred_check
        %p118 = pneg %p56
      $region14: #{tpu_custom_call.1} parent=11 // pred_check_branch
        %120 = sbr.rel (%p118) target = $region16
      $region15: #{tpu_custom_call.1} parent=11 // pred_region
        _
      $region16: #{tpu_custom_call.1} parent=11 // pred_fallthru
        _
      // Predicated region
      $region17: #{tpu_custom_call.1} parent=11 // pred_check
        %p121 = pneg %p77
      $region18: #{tpu_custom_call.1} parent=11 // pred_check_branch
        %123 = sbr.rel (%p121) target = $region20
      $region19: #{tpu_custom_call.1} parent=11 // pred_region
        _
      $region20: #{tpu_custom_call.1} parent=11 // pred_fallthru
        _
    $region12: #{tpu_custom_call.1} parent=5 // pred_fallthru
      _
    %p124 = scmp.lt.s32.totalorder %s9, 2
    // Predicated region
    $region21: #{tpu_custom_call.1} parent=5 // pred_check
      %p125 = pneg %p124
    $region22: #{tpu_custom_call.1} parent=5 // pred_check_branch
      %127 = sbr.rel (%p125) target = $region24
    $region23: #{tpu_custom_call.1} parent=5 // pred_region
      // Predicated region
      $region25: #{tpu_custom_call.1} parent=23 // pred_check
        %p128 = pneg %p29
      $region26: #{tpu_custom_call.1} parent=23 // pred_check_branch
        %130 = sbr.rel (%p128) target = $region28
      $region27: #{tpu_custom_call.1} parent=23 // pred_region
        %s131 = smul.u32 32, %s9
        %p132 = scmp.lt.s32.totalorder %s131, 63
        %s133 = scalar_select %p132, %s131, 63
        %s134 = smul.addr %s133, 2
        %s135 = smul.addr %s134, 4
        %s136 = scalar_lea.vmem %s0, %s135
        %s137 = smul.u32 32, %s9
      $region28: #{tpu_custom_call.1} parent=23 // pred_fallthru
        _
    $region24: #{tpu_custom_call.1} parent=5 // pred_fallthru
      _
    %p138 = scmp.le.s32.totalorder 1, %s9
    %p139 = scmp.lt.s32.totalorder %s9, 3
    %p140 = pnand %p138, %p139
    %p141 = pneg %p140
    // Predicated region
    $region29: #{tpu_custom_call.1} parent=5 // pred_check
      _
    $region30: #{tpu_custom_call.1} parent=5 // pred_check_branch
      %143 = sbr.rel (%p140) target = $region32
    $region31: #{tpu_custom_call.1} parent=5 // pred_region
      %s144 = ssub.s32 %s9, 1
      %s145 = smul.u32 32, %s14
      %p146 = scmp.lt.s32.totalorder %s145, 63
      %s147 = scalar_select %p146, %s145, 63
      %s148 = smul.addr %s147, 2
      %s149 = smul.addr %s148, 4
      %s150 = scalar_lea.vmem %s0, %s149
      %p151 = pneg %p35
      %p152 = pneg %p32
      %p153 = pneg %p56
      %p154 = pneg %p53
      %p155 = pneg %p77
      %p156 = pneg %p74
      %p157 = pneg %p103
      %p158 = pneg %p100
      %s159 = smul.u32 32, %s14
      %p160 = scmp.lt.s32.totalorder %s159, 63
      %s161 = scalar_select %p160, %s159, 63
      %s162 = smul.addr %s161, 4
      %s163 = scalar_lea.vmem %s3, %s162
      %s164 = smul.u32 32, %s14
      %p165 = scmp.lt.s32.totalorder %s164, 63
      %s166 = scalar_select %p165, %s164, 63
      %s167 = smul.addr %s166, 2
      %s168 = smul.addr %s167, 4
      %s169 = scalar_lea.vmem %s0, %s168
      %s170 = smul.u32 32, %s14
      %s171 = smul.u32 32, %s14
      %p172 = scmp.lt.s32.totalorder %s171, 63
      %s173 = scalar_select %p172, %s171, 63
      %s174 = smul.addr %s173, 4
      %s175 = scalar_lea.vmem %s3, %s174
      %s176 = smul.u32 32, %s14
      %v178 = vld [vmem:[%s169] sm:$0xff]
      %v179 = vld [vmem:[%s169 + $0x8] sm:$0xff]
      %v180 = vld [vmem:[%s169 + $0x10] sm:$0xff]
      %v181 = vld [vmem:[%s169 + $0x18] sm:$0xff]
      %v182 = vld [vmem:[%s169 + $0x20] sm:$0xff]
      %v183 = vld [vmem:[%s169 + $0x28] sm:$0xff]
      %v184 = vld [vmem:[%s169 + $0x30] sm:$0xff]
      %v185 = vld [vmem:[%s169 + $0x38] sm:$0xff]
      %v186 = vld [vmem:[%s169 + $0x40] sm:$0xff]
      %v187 = vld [vmem:[%s169 + $0x48] sm:$0xff]
      %v188 = vld [vmem:[%s169 + $0x50] sm:$0xff]
      %v189 = vld [vmem:[%s169 + $0x58] sm:$0xff]
      %v190 = vld [vmem:[%s169 + $0x60] sm:$0xff]
      %v191 = vld [vmem:[%s169 + $0x68] sm:$0xff]
      %v192 = vld [vmem:[%s169 + $0x70] sm:$0xff]
      %v193 = vld [vmem:[%s169 + $0x78] sm:$0xff]
      %v194 = vld [vmem:[%s169 + $0x80] sm:$0xff]
      %v195 = vld [vmem:[%s169 + $0x88] sm:$0xff]
      %v196 = vld [vmem:[%s169 + $0x90] sm:$0xff]
      %v197 = vld [vmem:[%s169 + $0x98] sm:$0xff]
      %v198 = vld [vmem:[%s169 + $0xa0] sm:$0xff]
      %v199 = vld [vmem:[%s169 + $0xa8] sm:$0xff]
      %v200 = vld [vmem:[%s169 + $0xb0] sm:$0xff]
      %v201 = vld [vmem:[%s169 + $0xb8] sm:$0xff]
      %v202 = vld [vmem:[%s169 + $0xc0] sm:$0xff]
      %v203 = vld [vmem:[%s169 + $0xc8] sm:$0xff]
      %v204 = vld [vmem:[%s169 + $0xd0] sm:$0xff]
      %v205 = vld [vmem:[%s169 + $0xd8] sm:$0xff]
      %v206 = vld [vmem:[%s169 + $0xe0] sm:$0xff]
      %v207 = vld [vmem:[%s169 + $0xe8] sm:$0xff]
      %v208 = vld [vmem:[%s169 + $0xf0] sm:$0xff]
      %v209 = vld [vmem:[%s169 + $0xf8] sm:$0xff]
      %v210 = vld [vmem:[%s1] sm:$0xf]
      %v211 = vld [vmem:[%s1 + $0x4] sm:$0xf]
      %v212 = vld [vmem:[%s1 + $0x8] sm:$0xf]
      %v213 = vld [vmem:[%s1 + $0xc] sm:$0xf]
      %v214 = vld [vmem:[%s1 + $0x10] sm:$0xf]
      %v215 = vld [vmem:[%s1 + $0x14] sm:$0xf]
      %v216 = vld [vmem:[%s1 + $0x18] sm:$0xf]
      %v217 = vld [vmem:[%s1 + $0x1c] sm:$0xf]
      %v218 = vld [vmem:[%s1 + $0x20] sm:$0xf]
      %v219 = vld [vmem:[%s1 + $0x24] sm:$0xf]
      %v220 = vld [vmem:[%s1 + $0x28] sm:$0xf]
      %v221 = vld [vmem:[%s1 + $0x2c] sm:$0xf]
      %v222 = vld [vmem:[%s1 + $0x30] sm:$0xf]
      %v223 = vld [vmem:[%s1 + $0x34] sm:$0xf]
      %v224 = vld [vmem:[%s1 + $0x38] sm:$0xf]
      %v225 = vld [vmem:[%s1 + $0x3c] sm:$0xf]
      %v226 = vld [vmem:[%s1 + $0x40] sm:$0xf]
      %v227 = vld [vmem:[%s1 + $0x44] sm:$0xf]
      %v228 = vld [vmem:[%s1 + $0x48] sm:$0xf]
      %v229 = vld [vmem:[%s1 + $0x4c] sm:$0xf]
      %v230 = vld [vmem:[%s1 + $0x50] sm:$0xf]
      %v231 = vld [vmem:[%s1 + $0x54] sm:$0xf]
      %v232 = vld [vmem:[%s1 + $0x58] sm:$0xf]
      %v233 = vld [vmem:[%s1 + $0x5c] sm:$0xf]
      %v234 = vld [vmem:[%s1 + $0x60] sm:$0x3]
      %v235 = vld [vmem:[%s2] sm:$0x1]
      %v237 = vperm.slane %v235, 0
      %v271 = vunpack.c.l.b16 %v178
      %v272 = vunpack.c.h.b16 %v178
      %v273 = vunpack.c.l.b16 %v179
      %v274 = vunpack.c.h.b16 %v179
      %v275 = vunpack.c.l.b16 %v180
      %v276 = vunpack.c.h.b16 %v180
      %v277 = vunpack.c.l.b16 %v181
      %v278 = vunpack.c.h.b16 %v181
      %v279 = vunpack.c.l.b16 %v182
      %v280 = vunpack.c.h.b16 %v182
      %v281 = vunpack.c.l.b16 %v183
      %v282 = vunpack.c.h.b16 %v183
      %v283 = vunpack.c.l.b16 %v184
      %v284 = vunpack.c.h.b16 %v184
      %v285 = vunpack.c.l.b16 %v185
      %v286 = vunpack.c.h.b16 %v185
      %v287 = vunpack.c.l.b16 %v186
      %v288 = vunpack.c.h.b16 %v186
      %v289 = vunpack.c.l.b16 %v187
      %v290 = vunpack.c.h.b16 %v187
      %v291 = vunpack.c.l.b16 %v188
      %v292 = vunpack.c.h.b16 %v188
      %v293 = vunpack.c.l.b16 %v189
      %v294 = vunpack.c.h.b16 %v189
      %v295 = vunpack.c.l.b16 %v190
      %v296 = vunpack.c.h.b16 %v190
      %v297 = vunpack.c.l.b16 %v191
      %v298 = vunpack.c.h.b16 %v191
      %v299 = vunpack.c.l.b16 %v192
      %v300 = vunpack.c.h.b16 %v192
      %v301 = vunpack.c.l.b16 %v193
      %v302 = vunpack.c.h.b16 %v193
      %v303 = vunpack.c.l.b16 %v194
      %v304 = vunpack.c.h.b16 %v194
      %v305 = vunpack.c.l.b16 %v195
      %v306 = vunpack.c.h.b16 %v195
      %v307 = vunpack.c.l.b16 %v196
      %v308 = vunpack.c.h.b16 %v196
      %v309 = vunpack.c.l.b16 %v197
      %v310 = vunpack.c.h.b16 %v197
      %v311 = vunpack.c.l.b16 %v198
      %v312 = vunpack.c.h.b16 %v198
      %v313 = vunpack.c.l.b16 %v199
      %v314 = vunpack.c.h.b16 %v199
      %v315 = vunpack.c.l.b16 %v200
      %v316 = vunpack.c.h.b16 %v200
      %v317 = vunpack.c.l.b16 %v201
      %v318 = vunpack.c.h.b16 %v201
      %v319 = vunpack.c.l.b16 %v202
      %v320 = vunpack.c.h.b16 %v202
      %v321 = vunpack.c.l.b16 %v203
      %v322 = vunpack.c.h.b16 %v203
      %v323 = vunpack.c.l.b16 %v204
      %v324 = vunpack.c.h.b16 %v204
      %v325 = vunpack.c.l.b16 %v205
      %v326 = vunpack.c.h.b16 %v205
      %v327 = vunpack.c.l.b16 %v206
      %v328 = vunpack.c.h.b16 %v206
      %v329 = vunpack.c.l.b16 %v207
      %v330 = vunpack.c.h.b16 %v207
      %v331 = vunpack.c.l.b16 %v208
      %v332 = vunpack.c.h.b16 %v208
      %v333 = vunpack.c.l.b16 %v209
      %v334 = vunpack.c.h.b16 %v209
      %v335 = vpack.c.b16 %v273, %v271
      %v336 = vpack.c.b16 %v274, %v272
      %v337 = vpack.c.b16 %v277, %v275
      %v338 = vpack.c.b16 %v278, %v276
      %v339 = vpack.c.b16 %v281, %v279
      %v340 = vpack.c.b16 %v282, %v280
      %v341 = vpack.c.b16 %v285, %v283
      %v342 = vpack.c.b16 %v286, %v284
      %v343 = vpack.c.b16 %v289, %v287
      %v344 = vpack.c.b16 %v290, %v288
      %v345 = vpack.c.b16 %v293, %v291
      %v346 = vpack.c.b16 %v294, %v292
      %v347 = vpack.c.b16 %v297, %v295
      %v348 = vpack.c.b16 %v298, %v296
      %v349 = vpack.c.b16 %v301, %v299
      %v350 = vpack.c.b16 %v302, %v300
      %v351 = vpack.c.b16 %v305, %v303
      %v352 = vpack.c.b16 %v306, %v304
      %v353 = vpack.c.b16 %v309, %v307
      %v354 = vpack.c.b16 %v310, %v308
      %v355 = vpack.c.b16 %v313, %v311
      %v356 = vpack.c.b16 %v314, %v312
      %v357 = vpack.c.b16 %v317, %v315
      %v358 = vpack.c.b16 %v318, %v316
      %v359 = vpack.c.b16 %v321, %v319
      %v360 = vpack.c.b16 %v322, %v320
      %v361 = vpack.c.b16 %v325, %v323
      %v362 = vpack.c.b16 %v326, %v324
      %v363 = vpack.c.b16 %v329, %v327
      %v364 = vpack.c.b16 %v330, %v328
      %v365 = vpack.c.b16 %v333, %v331
      %v366 = vpack.c.b16 %v334, %v332
      %v408 = vunpack.c.l.b16 %v210
      %v409 = vunpack.c.l.b16 %v211
      %v410 = vunpack.c.l.b16 %v212
      %v411 = vunpack.c.l.b16 %v213
      %v412 = vunpack.c.l.b16 %v214
      %v413 = vunpack.c.l.b16 %v215
      %v414 = vunpack.c.l.b16 %v216
      %v415 = vunpack.c.l.b16 %v217
      %v416 = vunpack.c.l.b16 %v218
      %v417 = vunpack.c.l.b16 %v219
      %v418 = vunpack.c.l.b16 %v220
      %v419 = vunpack.c.l.b16 %v221
      %v420 = vunpack.c.l.b16 %v222
      %v421 = vunpack.c.l.b16 %v223
      %v422 = vunpack.c.l.b16 %v224
      %v423 = vunpack.c.l.b16 %v225
      %v424 = vunpack.c.l.b16 %v226
      %v425 = vunpack.c.l.b16 %v227
      %v426 = vunpack.c.l.b16 %v228
      %v427 = vunpack.c.l.b16 %v229
      %v428 = vunpack.c.l.b16 %v230
      %v429 = vunpack.c.l.b16 %v231
      %v430 = vunpack.c.l.b16 %v232
      %v431 = vunpack.c.l.b16 %v233
      %v432 = vunpack.c.l.b16 %v234
      %v433 = vpack.c.b16 %v409, %v408
      %v434 = vpack.c.b16 %v411, %v410
      %v435 = vpack.c.b16 %v413, %v412
      %v436 = vpack.c.b16 %v415, %v414
      %v437 = vpack.c.b16 %v417, %v416
      %v438 = vpack.c.b16 %v419, %v418
      %v439 = vpack.c.b16 %v421, %v420
      %v440 = vpack.c.b16 %v423, %v422
      %v441 = vpack.c.b16 %v425, %v424
      %v442 = vpack.c.b16 %v427, %v426
      %v443 = vpack.c.b16 %v429, %v428
      %v444 = vpack.c.b16 %v431, %v430
      %v445 = vpack.c.b16 %v432, %v432
      %vm458 = vcmask 556032
      %v460 = vsel %vm458, %v336, 0
      %v463 = vsel %vm458, %v338, 0
      %v466 = vsel %vm458, %v340, 0
      %v469 = vsel %vm458, %v342, 0
      %v472 = vsel %vm458, %v344, 0
      %v475 = vsel %vm458, %v346, 0
      %v478 = vsel %vm458, %v348, 0
      %v481 = vsel %vm458, %v350, 0
      %v484 = vsel %vm458, %v352, 0
      %v487 = vsel %vm458, %v354, 0
      %v490 = vsel %vm458, %v356, 0
      %v493 = vsel %vm458, %v358, 0
      %v496 = vsel %vm458, %v360, 0
      %v499 = vsel %vm458, %v362, 0
      %v502 = vsel %vm458, %v364, 0
      %v505 = vsel %vm458, %v366, 0
      %vm507 = vcmask 1041408
      %v509 = vsel %vm507, %v445, 0
      %511 = vmatpush.bf16.msra.mxu0 %v440
      %512 = vmatpush.bf16.msra.mxu0 %v439
      %513 = vmatpush.bf16.msra.mxu0 %v438
      %514 = vmatpush.bf16.msra.mxu0 %v437
      %515 = vmatpush.bf16.msra.mxu0 %v436
      %516 = vmatpush.bf16.msra.mxu0 %v435
      %517 = vmatpush.bf16.msra.mxu0 %v434
      %518 = vmatpush.bf16.msra.mxu0 %v433
      %519 = vmatmul.bf16.gmra.mxu0 %v335
      %v520 = vpop.f32.mrf.mxu0
      %v521 = vadd.f32 %v237, %v520
      %v522 = vpop.f32.mrf.mxu0
      %v523 = vadd.f32 %v237, %v522
      %524 = vmatmul.bf16.gmra.mxu0 %v337
      %v525 = vpop.f32.mrf.mxu0
      %v526 = vadd.f32 %v237, %v525
      %v527 = vpop.f32.mrf.mxu0
      %v528 = vadd.f32 %v237, %v527
      %529 = vmatmul.bf16.gmra.mxu0 %v339
      %v530 = vpop.f32.mrf.mxu0
      %v531 = vadd.f32 %v237, %v530
      %v532 = vpop.f32.mrf.mxu0
      %v533 = vadd.f32 %v237, %v532
      %534 = vmatmul.bf16.gmra.mxu0 %v341
      %v535 = vpop.f32.mrf.mxu0
      %v536 = vadd.f32 %v237, %v535
      %v537 = vpop.f32.mrf.mxu0
      %v538 = vadd.f32 %v237, %v537
      %539 = vmatmul.bf16.gmra.mxu0 %v343
      %v540 = vpop.f32.mrf.mxu0
      %v541 = vadd.f32 %v237, %v540
      %v542 = vpop.f32.mrf.mxu0
      %v543 = vadd.f32 %v237, %v542
      %544 = vmatmul.bf16.gmra.mxu0 %v345
      %v545 = vpop.f32.mrf.mxu0
      %v546 = vadd.f32 %v237, %v545
      %v547 = vpop.f32.mrf.mxu0
      %v548 = vadd.f32 %v237, %v547
      %549 = vmatmul.bf16.gmra.mxu0 %v347
      %v550 = vpop.f32.mrf.mxu0
      %v551 = vadd.f32 %v237, %v550
      %v552 = vpop.f32.mrf.mxu0
      %v553 = vadd.f32 %v237, %v552
      %554 = vmatmul.bf16.gmra.mxu0 %v349
      %v555 = vpop.f32.mrf.mxu0
      %v556 = vadd.f32 %v237, %v555
      %v557 = vpop.f32.mrf.mxu0
      %v558 = vadd.f32 %v237, %v557
      %559 = vmatmul.bf16.gmra.mxu0 %v351
      %v560 = vpop.f32.mrf.mxu0
      %v561 = vadd.f32 %v237, %v560
      %v562 = vpop.f32.mrf.mxu0
      %v563 = vadd.f32 %v237, %v562
      %564 = vmatmul.bf16.gmra.mxu0 %v353
      %v565 = vpop.f32.mrf.mxu0
      %v566 = vadd.f32 %v237, %v565
      %v567 = vpop.f32.mrf.mxu0
      %v568 = vadd.f32 %v237, %v567
      %569 = vmatmul.bf16.gmra.mxu0 %v355
      %v570 = vpop.f32.mrf.mxu0
      %v571 = vadd.f32 %v237, %v570
      %v572 = vpop.f32.mrf.mxu0
      %v573 = vadd.f32 %v237, %v572
      %574 = vmatmul.bf16.gmra.mxu0 %v357
      %v575 = vpop.f32.mrf.mxu0
      %v576 = vadd.f32 %v237, %v575
      %v577 = vpop.f32.mrf.mxu0
      %v578 = vadd.f32 %v237, %v577
      %579 = vmatmul.bf16.gmra.mxu0 %v359
      %v580 = vpop.f32.mrf.mxu0
      %v581 = vadd.f32 %v237, %v580
      %v582 = vpop.f32.mrf.mxu0
      %v583 = vadd.f32 %v237, %v582
      %584 = vmatmul.bf16.gmra.mxu0 %v361
      %v585 = vpop.f32.mrf.mxu0
      %v586 = vadd.f32 %v237, %v585
      %v587 = vpop.f32.mrf.mxu0
      %v588 = vadd.f32 %v237, %v587
      %589 = vmatmul.bf16.gmra.mxu0 %v363
      %v590 = vpop.f32.mrf.mxu0
      %v591 = vadd.f32 %v237, %v590
      %v592 = vpop.f32.mrf.mxu0
      %v593 = vadd.f32 %v237, %v592
      %594 = vmatmul.bf16.gmra.mxu0 %v365
      %v595 = vpop.f32.mrf.mxu0
      %v596 = vadd.f32 %v237, %v595
      %v597 = vpop.f32.mrf.mxu0
      %v598 = vadd.f32 %v237, %v597
      %599 = vdwg.mxu0
      %600 = vmatpush.bf16.msra.mxu0 0
      %601 = vmatpush.bf16.msra.mxu0 0
      %602 = vmatpush.bf16.msra.mxu0 0
      %603 = vmatpush.bf16.msra.mxu0 %v509
      %604 = vmatpush.bf16.msra.mxu0 %v444
      %605 = vmatpush.bf16.msra.mxu0 %v443
      %606 = vmatpush.bf16.msra.mxu0 %v442
      %607 = vmatpush.bf16.msra.mxu0 %v441
      %608 = vmatmul.bf16.gmra.mxu0 %v460
      %v609 = vpop.f32.mrf.mxu0
      %v610 = vadd.f32 %v521, %v609
      %v611 = vpop.f32.mrf.mxu0
      %v612 = vadd.f32 %v523, %v611
      %613 = vmatmul.bf16.gmra.mxu0 %v463
      %v614 = vpop.f32.mrf.mxu0
      %v615 = vadd.f32 %v526, %v614
      %v616 = vpop.f32.mrf.mxu0
      %v617 = vadd.f32 %v528, %v616
      %618 = vmatmul.bf16.gmra.mxu0 %v466
      %v619 = vpop.f32.mrf.mxu0
      %v620 = vadd.f32 %v531, %v619
      %v621 = vpop.f32.mrf.mxu0
      %v622 = vadd.f32 %v533, %v621
      %623 = vmatmul.bf16.gmra.mxu0 %v469
      %v624 = vpop.f32.mrf.mxu0
      %v625 = vadd.f32 %v536, %v624
      %v626 = vpop.f32.mrf.mxu0
      %v627 = vadd.f32 %v538, %v626
      %628 = vmatmul.bf16.gmra.mxu0 %v472
      %v629 = vpop.f32.mrf.mxu0
      %v630 = vadd.f32 %v541, %v629
      %v631 = vpop.f32.mrf.mxu0
      %v632 = vadd.f32 %v543, %v631
      %633 = vmatmul.bf16.gmra.mxu0 %v475
      %v634 = vpop.f32.mrf.mxu0
      %v635 = vadd.f32 %v546, %v634
      %v636 = vpop.f32.mrf.mxu0
      %v637 = vadd.f32 %v548, %v636
      %638 = vmatmul.bf16.gmra.mxu0 %v478
      %v639 = vpop.f32.mrf.mxu0
      %v640 = vadd.f32 %v551, %v639
      %v641 = vpop.f32.mrf.mxu0
      %v642 = vadd.f32 %v553, %v641
      %643 = vmatmul.bf16.gmra.mxu0 %v481
      %v644 = vpop.f32.mrf.mxu0
      %v645 = vadd.f32 %v556, %v644
      %v646 = vpop.f32.mrf.mxu0
      %v647 = vadd.f32 %v558, %v646
      %648 = vmatmul.bf16.gmra.mxu0 %v484
      %v649 = vpop.f32.mrf.mxu0
      %v650 = vadd.f32 %v561, %v649
      %v651 = vpop.f32.mrf.mxu0
      %v652 = vadd.f32 %v563, %v651
      %653 = vmatmul.bf16.gmra.mxu0 %v487
      %v654 = vpop.f32.mrf.mxu0
      %v655 = vadd.f32 %v566, %v654
      %v656 = vpop.f32.mrf.mxu0
      %v657 = vadd.f32 %v568, %v656
      %658 = vmatmul.bf16.gmra.mxu0 %v490
      %v659 = vpop.f32.mrf.mxu0
      %v660 = vadd.f32 %v571, %v659
      %v661 = vpop.f32.mrf.mxu0
      %v662 = vadd.f32 %v573, %v661
      %663 = vmatmul.bf16.gmra.mxu0 %v493
      %v664 = vpop.f32.mrf.mxu0
      %v665 = vadd.f32 %v576, %v664
      %v666 = vpop.f32.mrf.mxu0
      %v667 = vadd.f32 %v578, %v666
      %668 = vmatmul.bf16.gmra.mxu0 %v496
      %v669 = vpop.f32.mrf.mxu0
      %v670 = vadd.f32 %v581, %v669
      %v671 = vpop.f32.mrf.mxu0
      %v672 = vadd.f32 %v583, %v671
      %673 = vmatmul.bf16.gmra.mxu0 %v499
      %v674 = vpop.f32.mrf.mxu0
      %v675 = vadd.f32 %v586, %v674
      %v676 = vpop.f32.mrf.mxu0
      %v677 = vadd.f32 %v588, %v676
      %678 = vmatmul.bf16.gmra.mxu0 %v502
      %v679 = vpop.f32.mrf.mxu0
      %v680 = vadd.f32 %v591, %v679
      %v681 = vpop.f32.mrf.mxu0
      %v682 = vadd.f32 %v593, %v681
      %683 = vmatmul.bf16.gmra.mxu0 %v505
      %v684 = vpop.f32.mrf.mxu0
      %v685 = vadd.f32 %v596, %v684
      %v686 = vpop.f32.mrf.mxu0
      %v687 = vadd.f32 %v598, %v686
      %688 = vdwg.mxu0
      %v689 = vmax.f32 %v610, 0.0
      %v690 = vmax.f32 %v612, 0.0
      %v691 = vmax.f32 %v615, 0.0
      %v692 = vmax.f32 %v617, 0.0
      %v693 = vmax.f32 %v620, 0.0
      %v694 = vmax.f32 %v622, 0.0
      %v695 = vmax.f32 %v625, 0.0
      %v696 = vmax.f32 %v627, 0.0
      %v697 = vmax.f32 %v630, 0.0
      %v698 = vmax.f32 %v632, 0.0
      %v699 = vmax.f32 %v635, 0.0
      %v700 = vmax.f32 %v637, 0.0
      %v701 = vmax.f32 %v640, 0.0
      %v702 = vmax.f32 %v642, 0.0
      %v703 = vmax.f32 %v645, 0.0
      %v704 = vmax.f32 %v647, 0.0
      %v705 = vmax.f32 %v650, 0.0
      %v706 = vmax.f32 %v652, 0.0
      %v707 = vmax.f32 %v655, 0.0
      %v708 = vmax.f32 %v657, 0.0
      %v709 = vmax.f32 %v660, 0.0
      %v710 = vmax.f32 %v662, 0.0
      %v711 = vmax.f32 %v665, 0.0
      %v712 = vmax.f32 %v667, 0.0
      %v713 = vmax.f32 %v670, 0.0
      %v714 = vmax.f32 %v672, 0.0
      %v715 = vmax.f32 %v675, 0.0
      %v716 = vmax.f32 %v677, 0.0
      %v717 = vmax.f32 %v680, 0.0
      %v718 = vmax.f32 %v682, 0.0
      %v719 = vmax.f32 %v685, 0.0
      %v720 = vmax.f32 %v687, 0.0
      %v721 = vpack.c.bf16 %v689, %v689
      %v722 = vpack.c.bf16 %v690, %v690
      %v723 = vpack.c.bf16 %v691, %v691
      %v724 = vpack.c.bf16 %v692, %v692
      %v725 = vpack.c.bf16 %v693, %v693
      %v726 = vpack.c.bf16 %v694, %v694
      %v727 = vpack.c.bf16 %v695, %v695
      %v728 = vpack.c.bf16 %v696, %v696
      %v729 = vpack.c.bf16 %v697, %v697
      %v730 = vpack.c.bf16 %v698, %v698
      %v731 = vpack.c.bf16 %v699, %v699
      %v732 = vpack.c.bf16 %v700, %v700
      %v733 = vpack.c.bf16 %v701, %v701
      %v734 = vpack.c.bf16 %v702, %v702
      %v735 = vpack.c.bf16 %v703, %v703
      %v736 = vpack.c.bf16 %v704, %v704
      %v737 = vpack.c.bf16 %v705, %v705
      %v738 = vpack.c.bf16 %v706, %v706
      %v739 = vpack.c.bf16 %v707, %v707
      %v740 = vpack.c.bf16 %v708, %v708
      %v741 = vpack.c.bf16 %v709, %v709
      %v742 = vpack.c.bf16 %v710, %v710
      %v743 = vpack.c.bf16 %v711, %v711
      %v744 = vpack.c.bf16 %v712, %v712
      %v745 = vpack.c.bf16 %v713, %v713
      %v746 = vpack.c.bf16 %v714, %v714
      %v747 = vpack.c.bf16 %v715, %v715
      %v748 = vpack.c.bf16 %v716, %v716
      %v749 = vpack.c.bf16 %v717, %v717
      %v750 = vpack.c.bf16 %v718, %v718
      %v751 = vpack.c.bf16 %v719, %v719
      %v752 = vpack.c.bf16 %v720, %v720
      %vm753 = vcmask 519168
      %754 = vst.msk [vmem:[%s175] sm:$0xf] %vm753, %v721
      %755 = vst.msk [vmem:[%s175 + $0x4] sm:$0xf] %vm753, %v722
      %756 = vst.msk [vmem:[%s175 + $0x8] sm:$0xf] %vm753, %v723
      %757 = vst.msk [vmem:[%s175 + $0xc] sm:$0xf] %vm753, %v724
      %758 = vst.msk [vmem:[%s175 + $0x10] sm:$0xf] %vm753, %v725
      %759 = vst.msk [vmem:[%s175 + $0x14] sm:$0xf] %vm753, %v726
      %760 = vst.msk [vmem:[%s175 + $0x18] sm:$0xf] %vm753, %v727
      %761 = vst.msk [vmem:[%s175 + $0x1c] sm:$0xf] %vm753, %v728
      %762 = vst.msk [vmem:[%s175 + $0x20] sm:$0xf] %vm753, %v729
      %763 = vst.msk [vmem:[%s175 + $0x24] sm:$0xf] %vm753, %v730
      %764 = vst.msk [vmem:[%s175 + $0x28] sm:$0xf] %vm753, %v731
      %765 = vst.msk [vmem:[%s175 + $0x2c] sm:$0xf] %vm753, %v732
      %766 = vst.msk [vmem:[%s175 + $0x30] sm:$0xf] %vm753, %v733
      %767 = vst.msk [vmem:[%s175 + $0x34] sm:$0xf] %vm753, %v734
      %768 = vst.msk [vmem:[%s175 + $0x38] sm:$0xf] %vm753, %v735
      %769 = vst.msk [vmem:[%s175 + $0x3c] sm:$0xf] %vm753, %v736
      %770 = vst.msk [vmem:[%s175 + $0x40] sm:$0xf] %vm753, %v737
      %771 = vst.msk [vmem:[%s175 + $0x44] sm:$0xf] %vm753, %v738
      %772 = vst.msk [vmem:[%s175 + $0x48] sm:$0xf] %vm753, %v739
      %773 = vst.msk [vmem:[%s175 + $0x4c] sm:$0xf] %vm753, %v740
      %774 = vst.msk [vmem:[%s175 + $0x50] sm:$0xf] %vm753, %v741
      %775 = vst.msk [vmem:[%s175 + $0x54] sm:$0xf] %vm753, %v742
      %776 = vst.msk [vmem:[%s175 + $0x58] sm:$0xf] %vm753, %v743
      %777 = vst.msk [vmem:[%s175 + $0x5c] sm:$0xf] %vm753, %v744
      %778 = vst.msk [vmem:[%s175 + $0x60] sm:$0xf] %vm753, %v745
      %779 = vst.msk [vmem:[%s175 + $0x64] sm:$0xf] %vm753, %v746
      %780 = vst.msk [vmem:[%s175 + $0x68] sm:$0xf] %vm753, %v747
      %781 = vst.msk [vmem:[%s175 + $0x6c] sm:$0xf] %vm753, %v748
      %782 = vst.msk [vmem:[%s175 + $0x70] sm:$0xf] %vm753, %v749
      %783 = vst.msk [vmem:[%s175 + $0x74] sm:$0xf] %vm753, %v750
      %784 = vst.msk [vmem:[%s175 + $0x78] sm:$0xf] %vm753, %v751
      %785 = vst.msk [vmem:[%s175 + $0x7c] sm:$0xf] %vm753, %v752
      %s786 = smul.u32 32, %s14
      %p787 = scmp.lt.s32.totalorder %s786, 63
      %s788 = scalar_select %p787, %s786, 63
      %s789 = smul.addr %s788, 4
      %s790 = scalar_lea.vmem %s3, %s789
      // Predicated region
      $region33: #{tpu_custom_call.1} parent=31 // pred_check
        %p791 = pneg %p100
      $region34: #{tpu_custom_call.1} parent=31 // pred_check_branch
        %793 = sbr.rel (%p791) target = $region36
      $region35: #{tpu_custom_call.1} parent=31 // pred_region
        %s794 = smul.u32 32, %s14
      $region36: #{tpu_custom_call.1} parent=31 // pred_fallthru
        _
    $region32: #{tpu_custom_call.1} parent=5 // pred_fallthru
      _
    %p795 = scmp.le.s32.totalorder 2, %s9
    // Predicated region
    $region37: #{tpu_custom_call.1} parent=5 // pred_check
      %p796 = pneg %p795
    $region38: #{tpu_custom_call.1} parent=5 // pred_check_branch
      %798 = sbr.rel (%p796) target = $region40
    $region39: #{tpu_custom_call.1} parent=5 // pred_region
      %s799 = ssub.s32 %s9, 2
      // Predicated region
      $region41: #{tpu_custom_call.1} parent=39 // pred_check
        %p800 = pneg %p106
      $region42: #{tpu_custom_call.1} parent=39 // pred_check_branch
        %802 = sbr.rel (%p800) target = $region44
      $region43: #{tpu_custom_call.1} parent=39 // pred_region
        %s803 = smul.u32 32, %s15
        %p804 = scmp.lt.s32.totalorder %s803, 63
        %s805 = scalar_select %p804, %s803, 63
        %s806 = smul.addr %s805, 4
        %s807 = scalar_lea.vmem %s3, %s806
      $region44: #{tpu_custom_call.1} parent=39 // pred_fallthru
        _
    $region40: #{tpu_custom_call.1} parent=5 // pred_fallthru
      _
  $region6: #{tpu_custom_call.1} parent=0 // loop_footer
    %s13 = sadd.s32 1, %s9
  $region7: #{tpu_custom_call.1} parent=0 // loop_footer_branch
    %8 = sbr.rel target = $region3
  $region8: #{tpu_custom_call.1} parent=0 // loop_exit
    _

</llo_original>
